<compile_context>
chip_gen: v5e
topology: v5e:2x2
jax: 0.10.0
libtpu: 0.0.40
codegen_flags: <defaults>
</compile_context>

<pallas_src>
import functools

import jax
import jax.numpy as jnp
from jax.experimental import pallas as pl
from jax.experimental.pallas import tpu as pltpu


def _joints_mse_kernel_w(pred_ref, gt_ref, w_ref, out_ref, *,
                         rows, tile_rows, need_mask):
    pred = pred_ref[...].astype(jnp.float32)   # (TILE_R, HW)
    gt = gt_ref[...].astype(jnp.float32)       # (TILE_R, HW)
    w = w_ref[...].astype(jnp.float32)         # (TILE_R, 1) -> broadcast over HW
    d = (pred - gt) * w
    if need_mask:
        # Last tile may extend past the true row count; zero those rows
        # (partial-block data beyond the array bound is unspecified).
        start = pl.program_id(0) * tile_rows
        row_ids = jax.lax.broadcasted_iota(jnp.int32, d.shape, 0) + start
        d = jnp.where(row_ids < rows, d, 0.0)
    # Per-lane partial sums (sublane reduction only; lane-dense unmasked store).
    out_ref[0] = jnp.sum(d * d, axis=0, keepdims=True)   # (1, HW)


def _joints_mse_kernel_nw(pred_ref, gt_ref, out_ref, *,
                          rows, tile_rows, need_mask):
    pred = pred_ref[...].astype(jnp.float32)
    gt = gt_ref[...].astype(jnp.float32)
    d = pred - gt
    if need_mask:
        start = pl.program_id(0) * tile_rows
        row_ids = jax.lax.broadcasted_iota(jnp.int32, d.shape, 0) + start
        d = jnp.where(row_ids < rows, d, 0.0)
    out_ref[0] = jnp.sum(d * d, axis=0, keepdims=True)   # (1, HW)


def _choose_tile_rows(R, HW, cap_rows=2048, tile_bytes=6 * 1024 * 1024):
    """Pick rows-per-tile: multiple of 8, VMEM-friendly, avoid masking if possible.

    Returns (tile_rows, need_mask). tile_bytes keeps a single f32 input tile
    <= ~6 MiB so 2 inputs x 2 pipeline buffers stay under the default 32 MiB
    scoped VMEM limit without compiler overrides.
    """
    bytes_per_row = max(1, HW * 4)
    vmem_cap = max(8, tile_bytes // bytes_per_row)
    cap = max(8, min(cap_rows, vmem_cap))
    cap = (cap // 8) * 8
    if R % 8 == 0:
        # Largest divisor of R that is a multiple of 8 and <= cap -> no masking.
        for t in range(cap, 7, -8):
            if R % t == 0:
                return t, False
    # Fallback: cdiv grid with an in-kernel row mask on the ragged tile.
    t = min(cap, ((R + 7) // 8) * 8)
    t = max(8, (t // 8) * 8)
    return t, (R % t != 0)


def joints_mse_loss(output, target, target_weight, use_target_weight=True):
    """output, target: (B, J, H, W); target_weight: (B, J, 1). Returns scalar loss."""
    B, J, H, W = output.shape
    HW = H * W
    R = B * J

    # Plain reshapes only (no transposes, no extra HBM traffic).
    pred = output.reshape(R, HW)
    gt = target.reshape(R, HW)

    TILE_R, need_mask = _choose_tile_rows(R, HW)
    num_tiles = pl.cdiv(R, TILE_R)

    in_arrays = [pred, gt]
    in_specs = [
        pl.BlockSpec((TILE_R, HW), lambda i: (i, 0)),
        pl.BlockSpec((TILE_R, HW), lambda i: (i, 0)),
    ]
    if use_target_weight:
        tw = target_weight.reshape(R, 1)
        in_arrays.append(tw)
        in_specs.append(pl.BlockSpec((TILE_R, 1), lambda i: (i, 0)))
        kernel = functools.partial(_joints_mse_kernel_w, rows=R,
                                   tile_rows=TILE_R, need_mask=need_mask)
    else:
        # No useless weight DMA in the unweighted variant.
        kernel = functools.partial(_joints_mse_kernel_nw, rows=R,
                                   tile_rows=TILE_R, need_mask=need_mask)

    partials = pl.pallas_call(
        kernel,
        out_shape=jax.ShapeDtypeStruct((num_tiles, 1, HW), jnp.float32),
        grid_spec=pltpu.PrefetchScalarGridSpec(
            num_scalar_prefetch=0,
            grid=(num_tiles,),
            in_specs=in_specs,
            out_specs=pl.BlockSpec((1, 1, HW), lambda i: (i, 0, 0)),
        ),
        compiler_params=pltpu.CompilerParams(
            dimension_semantics=("parallel",)),  # independent per-tile partials
    )(*in_arrays)

    # loss = (1/J) * sum_j 0.5 * mean_{b,hw}(...) = 0.5/(J*B*HW) * total_sq_sum.
    # Scaling applied once here (tile-size independent); the tiny partials
    # reduction is left to XLA outside the kernel.
    total = jnp.sum(partials)
    return total * (0.5 / (J * B * HW))


def _reference_loss(output, target, target_weight, use_target_weight=True):
    B, J, H, W = output.shape
    pred = output.reshape(B, J, -1)
    gt = target.reshape(B, J, -1)
    loss = 0.0
    for i in range(J):
        p = pred[:, i, :]
        g = gt[:, i, :]
        if use_target_weight:
            w = target_weight[:, i]  # (B, 1)
            p = p * w
            g = g * w
        loss += 0.5 * jnp.mean((p - g) ** 2)
    return loss / J


if __name__ == "__main__":
    key = jax.random.PRNGKey(0)
    k1, k2, k3 = jax.random.split(key, 3)

    # Main small-shape check (B, J, H, W) = (2, 4, 16, 16).
    B, J, H, W = 2, 4, 16, 16
    output = jax.random.normal(k1, (B, J, H, W), dtype=jnp.float32)
    target = jax.random.normal(k2, (B, J, H, W), dtype=jnp.float32)
    target_weight = jax.random.uniform(k3, (B, J, 1), dtype=jnp.float32)

    loss = joints_mse_loss(output, target, target_weight, use_target_weight=True)
    loss = jax.block_until_ready(loss)
    ref = _reference_loss(output, target, target_weight, use_target_weight=True)
    assert jnp.allclose(loss, ref, rtol=1e-5, atol=1e-6), (loss, ref)

    # Unweighted variant (separate kernel, no weight DMA).
    loss_nw = joints_mse_loss(output, target, target_weight, use_target_weight=False)
    loss_nw = jax.block_until_ready(loss_nw)
    ref_nw = _reference_loss(output, target, target_weight, use_target_weight=False)
    assert jnp.allclose(loss_nw, ref_nw, rtol=1e-5, atol=1e-6), (loss_nw, ref_nw)

    # Ragged row count (B*J not a multiple of 8) -> exercises the in-kernel mask.
    k4, k5, k6 = jax.random.split(jax.random.PRNGKey(1), 3)
    B2, J2 = 2, 5
    out2 = jax.random.normal(k4, (B2, J2, H, W), dtype=jnp.float32)
    tgt2 = jax.random.normal(k5, (B2, J2, H, W), dtype=jnp.float32)
    tw2 = jax.random.uniform(k6, (B2, J2, 1), dtype=jnp.float32)
    loss2 = joints_mse_loss(out2, tgt2, tw2, use_target_weight=True)
    loss2 = jax.block_until_ready(loss2)
    ref2 = _reference_loss(out2, tgt2, tw2, use_target_weight=True)
    assert jnp.allclose(loss2, ref2, rtol=1e-5, atol=1e-6), (loss2, ref2)

    print("KERNEL_OK")
</pallas_src>

<mosaic_0001>
module attributes {stable_mosaic.version = 11 : i64} {
  func.func @_joints_mse_kernel_w(%arg0: i32, %arg1: memref<8x256xf32, #tpu.memory_space<vmem>>, %arg2: memref<8x256xf32, #tpu.memory_space<vmem>>, %arg3: memref<8x1xf32, #tpu.memory_space<vmem>>, %arg4: memref<1x1x256xf32, #tpu.memory_space<vmem>>) attributes {dimension_semantics = [#tpu.dimension_semantics<parallel>], iteration_bounds = array<i64: 1>, scalar_prefetch = 0 : i64, scratch_operands = 0 : i64, tpu.core_type = #tpu.core_type<tc>, window_params = [{transform_indices = @transform_0, window_bounds = array<i64: 8, 256>}, {transform_indices = @transform_1, window_bounds = array<i64: 8, 256>}, {transform_indices = @transform_2, window_bounds = array<i64: 8, 1>}, {transform_indices = @transform_3, window_bounds = array<i64: 1, 1, 256>}]} {
    %c0 = arith.constant 0 : index
    %c0_0 = arith.constant 0 : index
    %0 = vector.load %arg1[%c0, %c0_0] : memref<8x256xf32, #tpu.memory_space<vmem>>, vector<8x256xf32>
    %c0_1 = arith.constant 0 : index
    %c0_2 = arith.constant 0 : index
    %1 = vector.load %arg2[%c0_1, %c0_2] : memref<8x256xf32, #tpu.memory_space<vmem>>, vector<8x256xf32>
    %c0_3 = arith.constant 0 : index
    %c0_4 = arith.constant 0 : index
    %2 = vector.load %arg3[%c0_3, %c0_4] : memref<8x1xf32, #tpu.memory_space<vmem>>, vector<8x1xf32>
    %3 = arith.subf %0, %1 : vector<8x256xf32>
    %4 = vector.broadcast %2 : vector<8x1xf32> to vector<8x256xf32>
    %5 = arith.mulf %3, %4 : vector<8x256xf32>
    %6 = arith.mulf %5, %5 : vector<8x256xf32>
    %cst = arith.constant dense<0.000000e+00> : vector<256xf32>
    %7 = vector.multi_reduction <add>, %6, %cst [0] : vector<8x256xf32> to vector<256xf32>
    %8 = vector.shape_cast %7 : vector<256xf32> to vector<1x256xf32>
    %c0_5 = arith.constant 0 : index
    %c0_6 = arith.constant 0 : index
    %c0_7 = arith.constant 0 : index
    %9 = vector.load %arg4[%c0_5, %c0_6, %c0_7] : memref<1x1x256xf32, #tpu.memory_space<vmem>>, vector<1x1x256xf32>
    %10 = vector.shape_cast %9 : vector<1x1x256xf32> to vector<1x256xf32>
    %11 = vector.shape_cast %8 : vector<1x256xf32> to vector<1x1x256xf32>
    tpu.vector_store %arg4[%c0_5, %c0_6, %c0_7], %11 {strides = array<i32>} : memref<1x1x256xf32, #tpu.memory_space<vmem>>, vector<1x1x256xf32>,
    return
  }
  func.func @transform_0(%arg0: i32) -> (i32, i32) {
    %c0_i32 = arith.constant 0 : i32
    %c0_i32_0 = arith.constant 0 : i32
    return %arg0, %c0_i32 : i32, i32
  }
  func.func @transform_1(%arg0: i32) -> (i32, i32) {
    %c0_i32 = arith.constant 0 : i32
    %c0_i32_0 = arith.constant 0 : i32
    return %arg0, %c0_i32 : i32, i32
  }
  func.func @transform_2(%arg0: i32) -> (i32, i32) {
    %c0_i32 = arith.constant 0 : i32
    %c0_i32_0 = arith.constant 0 : i32
    return %arg0, %c0_i32 : i32, i32
  }
  func.func @transform_3(%arg0: i32) -> (i32, i32, i32) {
    %c0_i32 = arith.constant 0 : i32
    %c0_i32_0 = arith.constant 0 : i32
    %c0_i32_1 = arith.constant 0 : i32
    return %arg0, %c0_i32, %c0_i32_0 : i32, i32, i32
  }
}

</mosaic_0001>

<llo_original>
// kernel: tpu_custom_call.1
$region0: #{tpu_custom_call.1}
  #allocation0 [shape = 'u32[]', space=smem, size = 0x4, offset = 0x4, fixed_abs, tag = 'smem constant byte address 0x4 - core index']
  #allocation1 [shape = 'u32[72,128]{1,0:T(1,128)}', space=vmem, size = 0x9000, scoped, tag = 'internal scratch']
  %s0 = inlined_call_operand.hbm [shape: f32[8,256], index: 0, kind: input, shape index: {}]
  %s1 = inlined_call_operand.hbm [shape: f32[8,256], index: 1, kind: input, shape index: {}]
  %s2 = inlined_call_operand.vmem [shape: f32[8,1], index: 2, kind: input, shape index: {}]
  %s3 = inlined_call_operand.hbm [shape: f32[1,1,256], index: 3, kind: output, shape index: {}]
  %s4 = sld [smem:[#allocation0]]
  $region30: #{tpu_custom_call.1} parent=0
    _
  %s6 = ssub.s32 1, %s4
  %s7 = scalar_select 0, %s6, %s4
  $region1: #{tpu_custom_call.1} parent=0
    #allocation2 [shape = 'u8[8192]{0}', space=vmem, size = 0x2000, scoped, tag = 'input window, operand 0, single buffered']
    #allocation3 [shape = 's32[1]{0}', space=sflag, size = 0x4, scoped, tag = 'scoped memory for tpu_custom_call.1']
    #allocation4 [shape = 's32[1]{0}', space=sflag, size = 0x4, scoped, tag = 'scoped memory for tpu_custom_call.1']
    #allocation5 [shape = 'u8[8192]{0}', space=vmem, size = 0x2000, scoped, tag = 'input window, operand 1, single buffered']
    #allocation6 [shape = 's32[1]{0}', space=sflag, size = 0x4, scoped, tag = 'scoped memory for tpu_custom_call.1']
    #allocation7 [shape = 'u8[1024]{0}', space=vmem, size = 0x400, scoped, tag = 'output window, operand 0, single buffered']
    %8 = vsyncpa [#allocation3], 0
    %9 = vsyncpa [#allocation6], 0
    %10 = vsyncpa [#allocation4], 0
    // Predicated region
    $region2: #{tpu_custom_call.1} parent=1 // pred_check
      _
    $region3: #{tpu_custom_call.1} parent=1 // pred_check_branch
      %12 = sbr.rel (0) target = $region5
    $region4: #{tpu_custom_call.1} parent=1 // pred_region
      %14 = vsyncadd [#allocation3], 0
      %s16 = sshll.u32 %s0, 4
      %s17 = int_to_ptr.hbm [resolvable:$true] %s16
      %s18 = sshll.u32 [#allocation2], 4
      %s19 = int_to_ptr.vmem [resolvable:$true] %s18
      %21 = dma.hbm_to_vmem [thread:$0]  %s17, 256, %s19, [#allocation3]
    $region5: #{tpu_custom_call.1} parent=1 // pred_fallthru
      _
    // Predicated region
    $region6: #{tpu_custom_call.1} parent=1 // pred_check
      _
    $region7: #{tpu_custom_call.1} parent=1 // pred_check_branch
      %23 = sbr.rel (0) target = $region9
    $region8: #{tpu_custom_call.1} parent=1 // pred_region
      %25 = vsyncadd [#allocation6], 0
      %s27 = sshll.u32 %s1, 4
      %s28 = int_to_ptr.hbm [resolvable:$true] %s27
      %s29 = sshll.u32 [#allocation5], 4
      %s30 = int_to_ptr.vmem [resolvable:$true] %s29
      %32 = dma.hbm_to_vmem [thread:$0]  %s28, 256, %s30, [#allocation6]
    $region9: #{tpu_custom_call.1} parent=1 // pred_fallthru
      _
    // Predicated region
    $region10: #{tpu_custom_call.1} parent=1 // pred_check
      _
    $region11: #{tpu_custom_call.1} parent=1 // pred_check_branch
      %34 = sbr.rel (0) target = $region13
    $region12: #{tpu_custom_call.1} parent=1 // pred_region
      _
    $region13: #{tpu_custom_call.1} parent=1 // pred_fallthru
      _
    // Predicated region
    $region14: #{tpu_custom_call.1} parent=1 // pred_check
      _
    $region15: #{tpu_custom_call.1} parent=1 // pred_check_branch
      %36 = sbr.rel (0) target = $region17
    $region16: #{tpu_custom_call.1} parent=1 // pred_region
      %38 = dma.done [#allocation3], 256
    $region17: #{tpu_custom_call.1} parent=1 // pred_fallthru
      _
    // Predicated region
    $region18: #{tpu_custom_call.1} parent=1 // pred_check
      _
    $region19: #{tpu_custom_call.1} parent=1 // pred_check_branch
      %40 = sbr.rel (0) target = $region21
    $region20: #{tpu_custom_call.1} parent=1 // pred_region
      %42 = dma.done [#allocation6], 256
    $region21: #{tpu_custom_call.1} parent=1 // pred_fallthru
      _
    %v43 = vld [vmem:[#allocation2] sm:$0xff]
    %v44 = vld [vmem:[#allocation2 + $0x8] sm:$0xff]
    %v45 = vld [vmem:[#allocation5] sm:$0xff]
    %v46 = vld [vmem:[#allocation5 + $0x8] sm:$0xff]
    %v47 = vld [vmem:[%s2] sm:$0xff]
    %v48 = vsub.f32 %v43, %v45
    %v49 = vsub.f32 %v44, %v46
    %51 = vset.pattern.permute.xlu0 0
    %52 = vperm.xlu0 %51, %v47
    %v53 = vpop.permute.xlu0 %52
    %v55 = vmul.f32 %v48, %v53
    %v56 = vmul.f32 %v49, %v53
    %v57 = vmul.f32 %v55, %v55
    %v58 = vmul.f32 %v56, %v56
    %v59 = vrot.slane %v57, 4
    %v60 = vadd.f32 %v57, %v59
    %v61 = vrot.slane %v60, 2
    %v62 = vadd.f32 %v60, %v61
    %v63 = vrot.slane %v62, 1
    %v64 = vadd.f32 %v62, %v63
    %v65 = vrot.slane %v58, 4
    %v66 = vadd.f32 %v58, %v65
    %v67 = vrot.slane %v66, 2
    %v68 = vadd.f32 %v66, %v67
    %v69 = vrot.slane %v68, 1
    %v70 = vadd.f32 %v68, %v69
    %v73 = vrot.slane %v70, 7
    %vm74 = vcmask 1040384
    %v75 = vsel %vm74, %v64, %v73
    %v77 = vlaneseq
    %vm78 = vcmp.ge.s32.totalorder %v77, 0
    %vm79 = vcmp.lt.s32.totalorder %v77, 256
    %vm80 = vmand %vm78, %vm79
    %81 = vst.msk [vmem:[#allocation7] sm:$0x3] %vm80, %v75
    // Predicated region
    $region22: #{tpu_custom_call.1} parent=1 // pred_check
      _
    $region23: #{tpu_custom_call.1} parent=1 // pred_check_branch
      %83 = sbr.rel (0) target = $region25
    $region24: #{tpu_custom_call.1} parent=1 // pred_region
      %85 = vsyncadd [#allocation4], 0
      %s87 = sshll.u32 [#allocation7], 4
      %s88 = int_to_ptr.vmem [resolvable:$true] %s87
      %s89 = sshll.u32 %s3, 4
      %s90 = int_to_ptr.hbm [resolvable:$true] %s89
      %92 = dma.vmem_to_hbm [thread:$0]  %s88, 32, %s90, [#allocation4]
    $region25: #{tpu_custom_call.1} parent=1 // pred_fallthru
      _
    // Predicated region
    $region26: #{tpu_custom_call.1} parent=1 // pred_check
      _
    $region27: #{tpu_custom_call.1} parent=1 // pred_check_branch
      %94 = sbr.rel (0) target = $region29
    $region28: #{tpu_custom_call.1} parent=1 // pred_region
      %96 = dma.done [#allocation4], 32
    $region29: #{tpu_custom_call.1} parent=1 // pred_fallthru
      _
    %97 = vsyncpa [#allocation3], 1
    %98 = vsyncpa [#allocation6], 1
    %99 = vsyncpa [#allocation4], 1

</llo_original>
